<compile_context>
chip_gen: v6e
topology: v6e:2x2x1
jax: 0.10.0
libtpu: 0.0.40
codegen_flags: <defaults>
</compile_context>

<pallas_src>
import functools

import jax
import jax.numpy as jnp
from jax.experimental import pallas as pl
from jax.experimental.pallas import tpu as pltpu

_LANE = 128
_SUBLANE = 8
_MAX_TILE_M = 1024            # rows per grid step (VMEM permitting)
_VMEM_BUDGET = 48 << 20       # conservative: fits v7x's 64 MiB physical VMEM


def _round_up(x, m):
    return ((x + m - 1) // m) * m


# ---------------------------------------------------------------------------
# Fused kernel: relu(x @ W1 + b1) -> relu(. @ W2 + b2) -> . @ W3 + b3
# (bias / BatchNorm already folded into W, b; dropout is identity in eval)
# ---------------------------------------------------------------------------
def _fused_mlp_kernel(x_ref, *refs, num_layers: int):
    o_ref = refs[-1]
    h = x_ref[...]                                   # (TILE_M, K) bf16 stream
    for li in range(num_layers):
        w_ref = refs[2 * li]                         # (K_l, N_l) bf16, resident
        b_ref = refs[2 * li + 1]                     # (1,  N_l) f32, resident
        lhs = h if h.dtype == w_ref.dtype else h.astype(w_ref.dtype)
        y = jnp.dot(lhs, w_ref[...],
                    preferred_element_type=jnp.float32)   # MXU, f32 accumulate
        y = y + b_ref[...]                           # f32 epilogue (VPU)
        if li < num_layers - 1:
            y = jnp.maximum(y, 0.0)                  # ReLU (hidden layers only)
        h = y
    o_ref[...] = h                                   # lane-dense f32 store


# ---------------------------------------------------------------------------
# Parameter construction: PyTorch-default-style uniform init, BN(eval) folded.
# ---------------------------------------------------------------------------
def init_mlp_params(key, input_size, hidden_sizes, output_size,
                    use_batchnorm=True, eps=1e-5, weight_dtype=jnp.bfloat16):
    sizes = [input_size] + list(hidden_sizes) + [output_size]
    num_layers = len(sizes) - 1
    params = []
    for li, (fan_in, fan_out) in enumerate(zip(sizes[:-1], sizes[1:])):
        key, kw, kb = jax.random.split(key, 3)
        bound = 1.0 / jnp.sqrt(jnp.float32(fan_in))
        # stored (in, out) == transpose of PyTorch's (out, in); same math.
        w = jax.random.uniform(kw, (fan_in, fan_out), jnp.float32,
                               minval=-bound, maxval=bound)
        b = jax.random.uniform(kb, (1, fan_out), jnp.float32,
                               minval=-bound, maxval=bound)
        is_last = (li == num_layers - 1)
        if use_batchnorm and not is_last:
            # BatchNorm1d eval with fresh params: gamma=1, beta=0, mean=0, var=1
            gamma = jnp.ones((fan_out,), jnp.float32)
            beta = jnp.zeros((fan_out,), jnp.float32)
            running_mean = jnp.zeros((fan_out,), jnp.float32)
            running_var = jnp.ones((fan_out,), jnp.float32)
            scale = gamma / jnp.sqrt(running_var + eps)
            shift = beta - running_mean * scale
            # fold BN into the linear layer (exact eval-mode equivalence)
            w = w * scale[None, :]
            b = b * scale[None, :] + shift[None, :]
        if is_last:
            # pad output width to a lane-dense multiple of 128; sliced outside.
            n_pad = _round_up(fan_out, _LANE)
            if n_pad != fan_out:
                w = jnp.pad(w, ((0, 0), (0, n_pad - fan_out)))
                b = jnp.pad(b, ((0, 0), (0, n_pad - fan_out)))
        params.append(dict(w=w.astype(weight_dtype),
                           b=b.astype(jnp.float32),
                           out_size=fan_out))
    return params


# ---------------------------------------------------------------------------
# M-tile selection: tile_m | sublane-padded batch (no wasted tail work), and
# grid_m >= 2 when possible so v7x's two TensorCores both get work.
# ---------------------------------------------------------------------------
def _choose_tile_m(b_pad, max_tile=_MAX_TILE_M):
    units = b_pad // _SUBLANE
    max_units = max(1, max_tile // _SUBLANE)
    best = 1
    for d in range(1, min(units, max_units) + 1):
        if units % d == 0:
            best = d
    tile_m = _SUBLANE * best
    grid_m = b_pad // tile_m
    if grid_m == 1 and units >= 2:
        # split M so the "parallel" axis shards across 2 TCs (v7x);
        # costs at most 8 rows of padding. Neutral on v5e/v6e.
        half = (units + 1) // 2
        tile_m = _SUBLANE * half
        grid_m = 2
    return tile_m, grid_m


# ---------------------------------------------------------------------------
# Forward: flatten -> single fused pallas_call -> slice padded rows/cols
# ---------------------------------------------------------------------------
def mlp_forward(x, params):
    if x.ndim > 2:
        x = x.reshape(x.shape[0], -1)      # matches torch x.view(B, -1)
    # PyTorch does x.float(); the kernel feeds the MXU in bf16 anyway, so we
    # stream bf16 from HBM (halves the dominant input stream, same result).
    x = x.astype(jnp.bfloat16)
    # TODO(synk): Dropout omitted (identity in eval mode); no RNG path needed.

    B, K = x.shape
    num_layers = len(params)
    n_out_pad = params[-1]["w"].shape[1]
    n_out = params[-1]["out_size"]

    b_pad = _round_up(B, _SUBLANE)
    tile_m, grid_m = _choose_tile_m(b_pad)

    # ---- VMEM-budget guard (resident weights + double-buffered tiles) ------
    bytes_params = sum(p["w"].size * p["w"].dtype.itemsize
                       + p["b"].size * 4 for p in params)
    widest = max(p["w"].shape[1] for p in params)

    def _tiles_bytes(tm):
        return (2 * tm * K * 2              # x tile (bf16) x double buffer
                + 2 * tm * n_out_pad * 4    # out tile (f32) x double buffer
                + 2 * tm * widest * 4)      # f32 intermediate activations

    while (2 * bytes_params + _tiles_bytes(tile_m) > _VMEM_BUDGET
           and tile_m > _SUBLANE):
        tile_m = _round_up(tile_m // 2, _SUBLANE)
        grid_m = pl.cdiv(b_pad, tile_m)
    if 2 * bytes_params + _tiles_bytes(tile_m) > _VMEM_BUDGET:
        # TODO(synk): layer-/K-tiled fallback (reduction grid axis + f32
        # accumulator scratch) for weight stacks that don't fit VMEM.
        raise NotImplementedError(
            "MLP weights too large for the fully-resident fused kernel")

    rows = tile_m * grid_m                  # >= B, padding <= tile_m - 1 (tiny)
    if rows != B:
        x = jnp.pad(x, ((0, rows - B), (0, 0)))

    in_specs = [pl.BlockSpec((tile_m, K), lambda i: (i, 0))]   # streamed rows
    flat_args = [x]
    for p in params:
        kk, nn = p["w"].shape
        # constant index_map -> weight/bias blocks stay resident across the grid
        in_specs.append(pl.BlockSpec((kk, nn), lambda i: (0, 0)))
        in_specs.append(pl.BlockSpec((1, nn), lambda i: (0, 0)))
        flat_args += [p["w"], p["b"]]

    flops = 2 * rows * sum(p["w"].shape[0] * p["w"].shape[1] for p in params)
    bytes_accessed = x.size * 2 + rows * n_out_pad * 4 + bytes_params
    vmem_limit = int(min(max(2 * (2 * bytes_params + _tiles_bytes(tile_m)),
                             16 << 20), 64 << 20))

    kernel = functools.partial(_fused_mlp_kernel, num_layers=num_layers)
    out = pl.pallas_call(
        kernel,
        out_shape=jax.ShapeDtypeStruct((rows, n_out_pad), jnp.float32),
        grid=(grid_m,),
        in_specs=in_specs,
        out_specs=pl.BlockSpec((tile_m, n_out_pad), lambda i: (i, 0)),
        compiler_params=pltpu.CompilerParams(
            dimension_semantics=("parallel",),      # shard M over TCs on v7x
            vmem_limit_bytes=vmem_limit),
        cost_estimate=pl.CostEstimate(flops=flops, transcendentals=0,
                                      bytes_accessed=bytes_accessed),
    )(*flat_args)
    return out[:B, :n_out]


# ---------------------------------------------------------------------------
# Pure-JAX reference (same bf16 weight / f32-accumulate math) for sanity.
# ---------------------------------------------------------------------------
def mlp_reference(x, params):
    if x.ndim > 2:
        x = x.reshape(x.shape[0], -1)
    h = x.astype(jnp.bfloat16)
    for li, p in enumerate(params):
        y = jnp.dot(h.astype(p["w"].dtype), p["w"],
                    preferred_element_type=jnp.float32) + p["b"]
        if li < len(params) - 1:
            y = jnp.maximum(y, 0.0)
        h = y
    return h[:, :params[-1]["out_size"]]


if __name__ == "__main__":
    # Config implied by the module: flattenable input, hidden stack, small output
    B, C, H, W = 2, 4, 16, 16
    input_size = C * H * W                 # 1024
    hidden_sizes = [256, 128]
    output_size = 8
    use_batchnorm = True

    key = jax.random.PRNGKey(0)
    key, kx = jax.random.split(key)
    x = jax.random.normal(kx, (B, C, H, W), dtype=jnp.float32)

    params = init_mlp_params(key, input_size, hidden_sizes, output_size,
                             use_batchnorm=use_batchnorm)

    out = mlp_forward(x, params)
    out = jax.block_until_ready(out)
    assert out.shape == (B, output_size), out.shape
    assert out.dtype == jnp.float32, out.dtype
    assert bool(jnp.all(jnp.isfinite(out))), "non-finite output"

    ref = jax.block_until_ready(mlp_reference(x, params))
    assert bool(jnp.allclose(out, ref, rtol=2e-2, atol=2e-2)), (
        "mismatch vs reference")
    print("KERNEL_OK")
</pallas_src>

<mosaic_0001>
module attributes {stable_mosaic.version = 11 : i64} {
  func.func @_fused_mlp_kernel(%arg0: i32, %arg1: memref<8x1024xbf16, #tpu.memory_space<vmem>>, %arg2: memref<1024x256xbf16, #tpu.memory_space<vmem>>, %arg3: memref<1x256xf32, #tpu.memory_space<vmem>>, %arg4: memref<256x128xbf16, #tpu.memory_space<vmem>>, %arg5: memref<1x128xf32, #tpu.memory_space<vmem>>, %arg6: memref<128x128xbf16, #tpu.memory_space<vmem>>, %arg7: memref<1x128xf32, #tpu.memory_space<vmem>>, %arg8: memref<8x128xf32, #tpu.memory_space<vmem>>) attributes {dimension_semantics = [#tpu.dimension_semantics<parallel>], iteration_bounds = array<i64: 1>, scalar_prefetch = 0 : i64, scratch_operands = 0 : i64, tpu.core_type = #tpu.core_type<tc>, window_params = [{transform_indices = @transform_0, window_bounds = array<i64: 8, 1024>}, {pipeline_mode = #tpu.pipeline_mode<synchronous>, transform_indices = @transform_1, window_bounds = array<i64: 1024, 256>}, {pipeline_mode = #tpu.pipeline_mode<synchronous>, transform_indices = @transform_2, window_bounds = array<i64: 1, 256>}, {pipeline_mode = #tpu.pipeline_mode<synchronous>, transform_indices = @transform_3, window_bounds = array<i64: 256, 128>}, {pipeline_mode = #tpu.pipeline_mode<synchronous>, transform_indices = @transform_4, window_bounds = array<i64: 1, 128>}, {pipeline_mode = #tpu.pipeline_mode<synchronous>, transform_indices = @transform_5, window_bounds = array<i64: 128, 128>}, {pipeline_mode = #tpu.pipeline_mode<synchronous>, transform_indices = @transform_6, window_bounds = array<i64: 1, 128>}, {transform_indices = @transform_7, window_bounds = array<i64: 8, 128>}]} {
    %c0 = arith.constant 0 : index
    %c0_0 = arith.constant 0 : index
    %0 = vector.load %arg1[%c0, %c0_0] : memref<8x1024xbf16, #tpu.memory_space<vmem>>, vector<8x1024xbf16>
    %c0_1 = arith.constant 0 : index
    %c0_2 = arith.constant 0 : index
    %1 = vector.load %arg2[%c0_1, %c0_2] : memref<1024x256xbf16, #tpu.memory_space<vmem>>, vector<1024x256xbf16>
    %cst = arith.constant dense<0.000000e+00> : vector<8x256xf32>
    %2 = tpu.matmul %0, %1, %cst {dimension_numbers = #tpu.dot_dimension_numbers<[1], [0], [0], [1], [0, 0, 1, 1], [], []>} : vector<8x1024xbf16>, vector<1024x256xbf16>, vector<8x256xf32> -> vector<8x256xf32>
    %c0_3 = arith.constant 0 : index
    %c0_4 = arith.constant 0 : index
    %3 = vector.load %arg3[%c0_3, %c0_4] : memref<1x256xf32, #tpu.memory_space<vmem>>, vector<1x256xf32>
    %4 = vector.broadcast %3 : vector<1x256xf32> to vector<8x256xf32>
    %5 = arith.addf %2, %4 : vector<8x256xf32>
    %cst_5 = arith.constant 0.000000e+00 : f32
    %6 = vector.broadcast %cst_5 : f32 to vector<8x256xf32>
    %7 = arith.maximumf %5, %6 : vector<8x256xf32>
    %8 = arith.truncf %7 : vector<8x256xf32> to vector<8x256xbf16>
    %c0_6 = arith.constant 0 : index
    %c0_7 = arith.constant 0 : index
    %9 = vector.load %arg4[%c0_6, %c0_7] : memref<256x128xbf16, #tpu.memory_space<vmem>>, vector<256x128xbf16>
    %cst_8 = arith.constant dense<0.000000e+00> : vector<8x128xf32>
    %10 = tpu.matmul %8, %9, %cst_8 {dimension_numbers = #tpu.dot_dimension_numbers<[1], [0], [0], [1], [0, 0, 1, 1], [], []>} : vector<8x256xbf16>, vector<256x128xbf16>, vector<8x128xf32> -> vector<8x128xf32>
    %c0_9 = arith.constant 0 : index
    %c0_10 = arith.constant 0 : index
    %11 = vector.load %arg5[%c0_9, %c0_10] : memref<1x128xf32, #tpu.memory_space<vmem>>, vector<1x128xf32>
    %12 = vector.broadcast %11 : vector<1x128xf32> to vector<8x128xf32>
    %13 = arith.addf %10, %12 : vector<8x128xf32>
    %cst_11 = arith.constant 0.000000e+00 : f32
    %14 = vector.broadcast %cst_11 : f32 to vector<8x128xf32>
    %15 = arith.maximumf %13, %14 : vector<8x128xf32>
    %16 = arith.truncf %15 : vector<8x128xf32> to vector<8x128xbf16>
    %c0_12 = arith.constant 0 : index
    %c0_13 = arith.constant 0 : index
    %17 = vector.load %arg6[%c0_12, %c0_13] : memref<128x128xbf16, #tpu.memory_space<vmem>>, vector<128x128xbf16>
    %cst_14 = arith.constant dense<0.000000e+00> : vector<8x128xf32>
    %18 = tpu.matmul %16, %17, %cst_14 {dimension_numbers = #tpu.dot_dimension_numbers<[1], [0], [0], [1], [0, 0, 1, 1], [], []>} : vector<8x128xbf16>, vector<128x128xbf16>, vector<8x128xf32> -> vector<8x128xf32>
    %c0_15 = arith.constant 0 : index
    %c0_16 = arith.constant 0 : index
    %19 = vector.load %arg7[%c0_15, %c0_16] : memref<1x128xf32, #tpu.memory_space<vmem>>, vector<1x128xf32>
    %20 = vector.broadcast %19 : vector<1x128xf32> to vector<8x128xf32>
    %21 = arith.addf %18, %20 : vector<8x128xf32>
    %c0_17 = arith.constant 0 : index
    %c0_18 = arith.constant 0 : index
    %22 = vector.load %arg8[%c0_17, %c0_18] : memref<8x128xf32, #tpu.memory_space<vmem>>, vector<8x128xf32>
    tpu.vector_store %arg8[%c0_17, %c0_18], %21 {strides = array<i32>} : memref<8x128xf32, #tpu.memory_space<vmem>>, vector<8x128xf32>,
    return
  }
  func.func @transform_0(%arg0: i32) -> (i32, i32) {
    %c0_i32 = arith.constant 0 : i32
    %c0_i32_0 = arith.constant 0 : i32
    return %arg0, %c0_i32 : i32, i32
  }
  func.func @transform_1(%arg0: i32) -> (i32, i32) {
    %c0_i32 = arith.constant 0 : i32
    %c0_i32_0 = arith.constant 0 : i32
    %c0_i32_1 = arith.constant 0 : i32
    return %c0_i32, %c0_i32_0 : i32, i32
  }
  func.func @transform_2(%arg0: i32) -> (i32, i32) {
    %c0_i32 = arith.constant 0 : i32
    %c0_i32_0 = arith.constant 0 : i32
    %c0_i32_1 = arith.constant 0 : i32
    return %c0_i32, %c0_i32_0 : i32, i32
  }
  func.func @transform_3(%arg0: i32) -> (i32, i32) {
    %c0_i32 = arith.constant 0 : i32
    %c0_i32_0 = arith.constant 0 : i32
    %c0_i32_1 = arith.constant 0 : i32
    return %c0_i32, %c0_i32_0 : i32, i32
  }
  func.func @transform_4(%arg0: i32) -> (i32, i32) {
    %c0_i32 = arith.constant 0 : i32
    %c0_i32_0 = arith.constant 0 : i32
    %c0_i32_1 = arith.constant 0 : i32
    return %c0_i32, %c0_i32_0 : i32, i32
  }
  func.func @transform_5(%arg0: i32) -> (i32, i32) {
    %c0_i32 = arith.constant 0 : i32
    %c0_i32_0 = arith.constant 0 : i32
    %c0_i32_1 = arith.constant 0 : i32
    return %c0_i32, %c0_i32_0 : i32, i32
  }
  func.func @transform_6(%arg0: i32) -> (i32, i32) {
    %c0_i32 = arith.constant 0 : i32
    %c0_i32_0 = arith.constant 0 : i32
    %c0_i32_1 = arith.constant 0 : i32
    return %c0_i32, %c0_i32_0 : i32, i32
  }
  func.func @transform_7(%arg0: i32) -> (i32, i32) {
    %c0_i32 = arith.constant 0 : i32
    %c0_i32_0 = arith.constant 0 : i32
    return %arg0, %c0_i32 : i32, i32
  }
}

</mosaic_0001>

<llo_original>
// kernel: tpu_custom_call.1
$region0: #{tpu_custom_call.1}
  #allocation0 [shape = 'u32[]', space=smem, size = 0x4, offset = 0x4, fixed_abs, tag = 'smem constant byte address 0x4 - core index']
  #allocation1 [shape = 'u32[144,128]{1,0:T(1,128)}', space=vmem, size = 0x12000, scoped, tag = 'internal scratch']
  %s0 = inlined_call_operand.hbm [shape: bf16[8,1024], index: 0, kind: input, shape index: {}]
  %s1 = inlined_call_operand.hbm [shape: bf16[1024,256], index: 1, kind: input, shape index: {}]
  %s2 = inlined_call_operand.vmem [shape: f32[1,256], index: 2, kind: input, shape index: {}]
  %s3 = inlined_call_operand.hbm [shape: bf16[256,128], index: 3, kind: input, shape index: {}]
  %s4 = inlined_call_operand.vmem [shape: f32[1,128], index: 4, kind: input, shape index: {}]
  %s5 = inlined_call_operand.hbm [shape: bf16[128,128], index: 5, kind: input, shape index: {}]
  %s6 = inlined_call_operand.vmem [shape: f32[1,128], index: 6, kind: input, shape index: {}]
  %s7 = inlined_call_operand.hbm [shape: f32[8,128], index: 7, kind: output, shape index: {}]
  %s8 = sld [smem:[#allocation0]]
  $region54: #{tpu_custom_call.1} parent=0
    _
  %s10 = ssub.s32 1, %s8
  %s11 = scalar_select 0, %s10, %s8
  $region1: #{tpu_custom_call.1} parent=0
    #allocation2 [shape = 'u8[16384]{0}', space=vmem, size = 0x4000, scoped, tag = 'input window, operand 0, single buffered']
    #allocation3 [shape = 's32[1]{0}', space=sflag, size = 0x4, scoped, tag = 'scoped memory for tpu_custom_call.1']
    #allocation4 [shape = 's32[1]{0}', space=sflag, size = 0x4, scoped, tag = 'scoped memory for tpu_custom_call.1']
    #allocation5 [shape = 'u8[524288]{0}', space=vmem, size = 0x80000, scoped, tag = 'input window, operand 1, single buffered']
    #allocation6 [shape = 's32[1]{0}', space=sflag, size = 0x4, scoped, tag = 'scoped memory for tpu_custom_call.1']
    #allocation7 [shape = 'u8[65536]{0}', space=vmem, size = 0x10000, scoped, tag = 'input window, operand 3, single buffered']
    #allocation8 [shape = 'u8[32768]{0}', space=vmem, size = 0x8000, scoped, tag = 'input window, operand 5, single buffered']
    #allocation9 [shape = 's32[1]{0}', space=sflag, size = 0x4, scoped, tag = 'scoped memory for tpu_custom_call.1']
    #allocation10 [shape = 'u8[4096]{0}', space=vmem, size = 0x1000, scoped, tag = 'output window, operand 0, single buffered']
    %12 = vsyncpa [#allocation3], 0
    %13 = vsyncpa [#allocation6], 0
    %14 = vsyncpa [#allocation9], 0
    %15 = vsyncpa [#allocation4], 0
    // Predicated region
    $region2: #{tpu_custom_call.1} parent=1 // pred_check
      _
    $region3: #{tpu_custom_call.1} parent=1 // pred_check_branch
      %17 = sbr.rel (0) target = $region5
    $region4: #{tpu_custom_call.1} parent=1 // pred_region
      %s19 = ssub.s32 512, 512
      %20 = vsyncadd [#allocation3], %s19
      %s22 = sshll.u32 [#allocation2], 4
      %s23 = int_to_ptr.vmem [resolvable:$true] %s22
      %25 = dma.hbm_to_vmem [thread:$0]  %s0, 512, %s23, [#allocation3]
    $region5: #{tpu_custom_call.1} parent=1 // pred_fallthru
      _
    // Predicated region
    $region6: #{tpu_custom_call.1} parent=1 // pred_check
      _
    $region7: #{tpu_custom_call.1} parent=1 // pred_check_branch
      %27 = sbr.rel (0) target = $region9
    $region8: #{tpu_custom_call.1} parent=1 // pred_region
      %s29 = ssub.s32 16384, 16384
      %30 = vsyncadd [#allocation6], %s29
      %s31 = sshll.u32 [#allocation5], 4
      %s32 = int_to_ptr.vmem [resolvable:$true] %s31
      %37 = dma.hbm_to_vmem [thread:$0]  %s1, 16384, %s32, [#allocation6], 128, 128, 8
    $region9: #{tpu_custom_call.1} parent=1 // pred_fallthru
      _
    // Predicated region
    $region10: #{tpu_custom_call.1} parent=1 // pred_check
      _
    $region11: #{tpu_custom_call.1} parent=1 // pred_check_branch
      %39 = sbr.rel (0) target = $region13
    $region12: #{tpu_custom_call.1} parent=1 // pred_region
      _
    $region13: #{tpu_custom_call.1} parent=1 // pred_fallthru
      _
    // Predicated region
    $region14: #{tpu_custom_call.1} parent=1 // pred_check
      _
    $region15: #{tpu_custom_call.1} parent=1 // pred_check_branch
      %41 = sbr.rel (0) target = $region17
    $region16: #{tpu_custom_call.1} parent=1 // pred_region
      %s43 = ssub.s32 2048, 2048
      %44 = vsyncadd [#allocation6], %s43
      %s45 = sshll.u32 [#allocation7], 4
      %s46 = int_to_ptr.vmem [resolvable:$true] %s45
      %51 = dma.hbm_to_vmem [thread:$0]  %s3, 2048, %s46, [#allocation6], 64, 64, 4
    $region17: #{tpu_custom_call.1} parent=1 // pred_fallthru
      _
    // Predicated region
    $region18: #{tpu_custom_call.1} parent=1 // pred_check
      _
    $region19: #{tpu_custom_call.1} parent=1 // pred_check_branch
      %53 = sbr.rel (0) target = $region21
    $region20: #{tpu_custom_call.1} parent=1 // pred_region
      _
    $region21: #{tpu_custom_call.1} parent=1 // pred_fallthru
      _
    // Predicated region
    $region22: #{tpu_custom_call.1} parent=1 // pred_check
      _
    $region23: #{tpu_custom_call.1} parent=1 // pred_check_branch
      %55 = sbr.rel (0) target = $region25
    $region24: #{tpu_custom_call.1} parent=1 // pred_region
      %s57 = ssub.s32 1024, 1024
      %58 = vsyncadd [#allocation9], %s57
      %s59 = sshll.u32 [#allocation8], 4
      %s60 = int_to_ptr.vmem [resolvable:$true] %s59
      %65 = dma.hbm_to_vmem [thread:$0]  %s5, 1024, %s60, [#allocation9], 64, 64, 4
    $region25: #{tpu_custom_call.1} parent=1 // pred_fallthru
      _
    // Predicated region
    $region26: #{tpu_custom_call.1} parent=1 // pred_check
      _
    $region27: #{tpu_custom_call.1} parent=1 // pred_check_branch
      %67 = sbr.rel (0) target = $region29
    $region28: #{tpu_custom_call.1} parent=1 // pred_region
      _
    $region29: #{tpu_custom_call.1} parent=1 // pred_fallthru
      _
    // Predicated region
    $region30: #{tpu_custom_call.1} parent=1 // pred_check
      _
    $region31: #{tpu_custom_call.1} parent=1 // pred_check_branch
      %69 = sbr.rel (0) target = $region33
    $region32: #{tpu_custom_call.1} parent=1 // pred_region
      %70 = dma.done [#allocation3], 512
    $region33: #{tpu_custom_call.1} parent=1 // pred_fallthru
      _
    // Predicated region
    $region34: #{tpu_custom_call.1} parent=1 // pred_check
      _
    $region35: #{tpu_custom_call.1} parent=1 // pred_check_branch
      %72 = sbr.rel (0) target = $region37
    $region36: #{tpu_custom_call.1} parent=1 // pred_region
      %73 = dma.done [#allocation6], 16384
    $region37: #{tpu_custom_call.1} parent=1 // pred_fallthru
      _
    // Predicated region
    $region38: #{tpu_custom_call.1} parent=1 // pred_check
      _
    $region39: #{tpu_custom_call.1} parent=1 // pred_check_branch
      %75 = sbr.rel (0) target = $region41
    $region40: #{tpu_custom_call.1} parent=1 // pred_region
      %76 = dma.done [#allocation6], 2048
    $region41: #{tpu_custom_call.1} parent=1 // pred_fallthru
      _
    // Predicated region
    $region42: #{tpu_custom_call.1} parent=1 // pred_check
      _
    $region43: #{tpu_custom_call.1} parent=1 // pred_check_branch
      %78 = sbr.rel (0) target = $region45
    $region44: #{tpu_custom_call.1} parent=1 // pred_region
      %79 = dma.done [#allocation9], 1024
    $region45: #{tpu_custom_call.1} parent=1 // pred_fallthru
      _
    %v81 = vld [vmem:[#allocation2] sm:$0xff]
    %v82 = vld [vmem:[#allocation2 + $0x8] sm:$0xff]
    %v83 = vld [vmem:[#allocation2 + $0x10] sm:$0xff]
    %v84 = vld [vmem:[#allocation2 + $0x18] sm:$0xff]
    %v85 = vld [vmem:[#allocation5] sm:$0xff]
    %v86 = vld [vmem:[#allocation5 + $0x8] sm:$0xff]
    %v87 = vld [vmem:[#allocation5 + $0x10] sm:$0xff]
    %v88 = vld [vmem:[#allocation5 + $0x18] sm:$0xff]
    %v89 = vld [vmem:[#allocation5 + $0x20] sm:$0xff]
    %v90 = vld [vmem:[#allocation5 + $0x28] sm:$0xff]
    %v91 = vld [vmem:[#allocation5 + $0x30] sm:$0xff]
    %v92 = vld [vmem:[#allocation5 + $0x38] sm:$0xff]
    %v93 = vld [vmem:[#allocation5 + $0x40] sm:$0xff]
    %v94 = vld [vmem:[#allocation5 + $0x48] sm:$0xff]
    %v95 = vld [vmem:[#allocation5 + $0x50] sm:$0xff]
    %v96 = vld [vmem:[#allocation5 + $0x58] sm:$0xff]
    %v97 = vld [vmem:[#allocation5 + $0x60] sm:$0xff]
    %v98 = vld [vmem:[#allocation5 + $0x68] sm:$0xff]
    %v99 = vld [vmem:[#allocation5 + $0x70] sm:$0xff]
    %v100 = vld [vmem:[#allocation5 + $0x78] sm:$0xff]
    %v101 = vld [vmem:[#allocation5 + $0x80] sm:$0xff]
    %v102 = vld [vmem:[#allocation5 + $0x88] sm:$0xff]
    %v103 = vld [vmem:[#allocation5 + $0x90] sm:$0xff]
    %v104 = vld [vmem:[#allocation5 + $0x98] sm:$0xff]
    %v105 = vld [vmem:[#allocation5 + $0xa0] sm:$0xff]
    %v106 = vld [vmem:[#allocation5 + $0xa8] sm:$0xff]
    %v107 = vld [vmem:[#allocation5 + $0xb0] sm:$0xff]
    %v108 = vld [vmem:[#allocation5 + $0xb8] sm:$0xff]
    %v109 = vld [vmem:[#allocation5 + $0xc0] sm:$0xff]
    %v110 = vld [vmem:[#allocation5 + $0xc8] sm:$0xff]
    %v111 = vld [vmem:[#allocation5 + $0xd0] sm:$0xff]
    %v112 = vld [vmem:[#allocation5 + $0xd8] sm:$0xff]
    %v113 = vld [vmem:[#allocation5 + $0xe0] sm:$0xff]
    %v114 = vld [vmem:[#allocation5 + $0xe8] sm:$0xff]
    %v115 = vld [vmem:[#allocation5 + $0xf0] sm:$0xff]
    %v116 = vld [vmem:[#allocation5 + $0xf8] sm:$0xff]
    %v117 = vld [vmem:[#allocation5 + $0x100] sm:$0xff]
    %v118 = vld [vmem:[#allocation5 + $0x108] sm:$0xff]
    %v119 = vld [vmem:[#allocation5 + $0x110] sm:$0xff]
    %v120 = vld [vmem:[#allocation5 + $0x118] sm:$0xff]
    %v121 = vld [vmem:[#allocation5 + $0x120] sm:$0xff]
    %v122 = vld [vmem:[#allocation5 + $0x128] sm:$0xff]
    %v123 = vld [vmem:[#allocation5 + $0x130] sm:$0xff]
    %v124 = vld [vmem:[#allocation5 + $0x138] sm:$0xff]
    %v125 = vld [vmem:[#allocation5 + $0x140] sm:$0xff]
    %v126 = vld [vmem:[#allocation5 + $0x148] sm:$0xff]
    %v127 = vld [vmem:[#allocation5 + $0x150] sm:$0xff]
    %v128 = vld [vmem:[#allocation5 + $0x158] sm:$0xff]
    %v129 = vld [vmem:[#allocation5 + $0x160] sm:$0xff]
    %v130 = vld [vmem:[#allocation5 + $0x168] sm:$0xff]
    %v131 = vld [vmem:[#allocation5 + $0x170] sm:$0xff]
    %v132 = vld [vmem:[#allocation5 + $0x178] sm:$0xff]
    %v133 = vld [vmem:[#allocation5 + $0x180] sm:$0xff]
    %v134 = vld [vmem:[#allocation5 + $0x188] sm:$0xff]
    %v135 = vld [vmem:[#allocation5 + $0x190] sm:$0xff]
    %v136 = vld [vmem:[#allocation5 + $0x198] sm:$0xff]
    %v137 = vld [vmem:[#allocation5 + $0x1a0] sm:$0xff]
    %v138 = vld [vmem:[#allocation5 + $0x1a8] sm:$0xff]
    %v139 = vld [vmem:[#allocation5 + $0x1b0] sm:$0xff]
    %v140 = vld [vmem:[#allocation5 + $0x1b8] sm:$0xff]
    %v141 = vld [vmem:[#allocation5 + $0x1c0] sm:$0xff]
    %v142 = vld [vmem:[#allocation5 + $0x1c8] sm:$0xff]
    %v143 = vld [vmem:[#allocation5 + $0x1d0] sm:$0xff]
    %v144 = vld [vmem:[#allocation5 + $0x1d8] sm:$0xff]
    %v145 = vld [vmem:[#allocation5 + $0x1e0] sm:$0xff]
    %v146 = vld [vmem:[#allocation5 + $0x1e8] sm:$0xff]
    %v147 = vld [vmem:[#allocation5 + $0x1f0] sm:$0xff]
    %v148 = vld [vmem:[#allocation5 + $0x1f8] sm:$0xff]
    %v149 = vld [vmem:[#allocation5 + $0x200] sm:$0xff]
    %v150 = vld [vmem:[#allocation5 + $0x208] sm:$0xff]
    %v151 = vld [vmem:[#allocation5 + $0x210] sm:$0xff]
    %v152 = vld [vmem:[#allocation5 + $0x218] sm:$0xff]
    %v153 = vld [vmem:[#allocation5 + $0x220] sm:$0xff]
    %v154 = vld [vmem:[#allocation5 + $0x228] sm:$0xff]
    %v155 = vld [vmem:[#allocation5 + $0x230] sm:$0xff]
    %v156 = vld [vmem:[#allocation5 + $0x238] sm:$0xff]
    %v157 = vld [vmem:[#allocation5 + $0x240] sm:$0xff]
    %v158 = vld [vmem:[#allocation5 + $0x248] sm:$0xff]
    %v159 = vld [vmem:[#allocation5 + $0x250] sm:$0xff]
    %v160 = vld [vmem:[#allocation5 + $0x258] sm:$0xff]
    %v161 = vld [vmem:[#allocation5 + $0x260] sm:$0xff]
    %v162 = vld [vmem:[#allocation5 + $0x268] sm:$0xff]
    %v163 = vld [vmem:[#allocation5 + $0x270] sm:$0xff]
    %v164 = vld [vmem:[#allocation5 + $0x278] sm:$0xff]
    %v165 = vld [vmem:[#allocation5 + $0x280] sm:$0xff]
    %v166 = vld [vmem:[#allocation5 + $0x288] sm:$0xff]
    %v167 = vld [vmem:[#allocation5 + $0x290] sm:$0xff]
    %v168 = vld [vmem:[#allocation5 + $0x298] sm:$0xff]
    %v169 = vld [vmem:[#allocation5 + $0x2a0] sm:$0xff]
    %v170 = vld [vmem:[#allocation5 + $0x2a8] sm:$0xff]
    %v171 = vld [vmem:[#allocation5 + $0x2b0] sm:$0xff]
    %v172 = vld [vmem:[#allocation5 + $0x2b8] sm:$0xff]
    %v173 = vld [vmem:[#allocation5 + $0x2c0] sm:$0xff]
    %v174 = vld [vmem:[#allocation5 + $0x2c8] sm:$0xff]
    %v175 = vld [vmem:[#allocation5 + $0x2d0] sm:$0xff]
    %v176 = vld [vmem:[#allocation5 + $0x2d8] sm:$0xff]
    %v177 = vld [vmem:[#allocation5 + $0x2e0] sm:$0xff]
    %v178 = vld [vmem:[#allocation5 + $0x2e8] sm:$0xff]
    %v179 = vld [vmem:[#allocation5 + $0x2f0] sm:$0xff]
    %v180 = vld [vmem:[#allocation5 + $0x2f8] sm:$0xff]
    %v181 = vld [vmem:[#allocation5 + $0x300] sm:$0xff]
    %v182 = vld [vmem:[#allocation5 + $0x308] sm:$0xff]
    %v183 = vld [vmem:[#allocation5 + $0x310] sm:$0xff]
    %v184 = vld [vmem:[#allocation5 + $0x318] sm:$0xff]
    %v185 = vld [vmem:[#allocation5 + $0x320] sm:$0xff]
    %v186 = vld [vmem:[#allocation5 + $0x328] sm:$0xff]
    %v187 = vld [vmem:[#allocation5 + $0x330] sm:$0xff]
    %v188 = vld [vmem:[#allocation5 + $0x338] sm:$0xff]
    %v189 = vld [vmem:[#allocation5 + $0x340] sm:$0xff]
    %v190 = vld [vmem:[#allocation5 + $0x348] sm:$0xff]
    %v191 = vld [vmem:[#allocation5 + $0x350] sm:$0xff]
    %v192 = vld [vmem:[#allocation5 + $0x358] sm:$0xff]
    %v193 = vld [vmem:[#allocation5 + $0x360] sm:$0xff]
    %v194 = vld [vmem:[#allocation5 + $0x368] sm:$0xff]
    %v195 = vld [vmem:[#allocation5 + $0x370] sm:$0xff]
    %v196 = vld [vmem:[#allocation5 + $0x378] sm:$0xff]
    %v197 = vld [vmem:[#allocation5 + $0x380] sm:$0xff]
    %v198 = vld [vmem:[#allocation5 + $0x388] sm:$0xff]
    %v199 = vld [vmem:[#allocation5 + $0x390] sm:$0xff]
    %v200 = vld [vmem:[#allocation5 + $0x398] sm:$0xff]
    %v201 = vld [vmem:[#allocation5 + $0x3a0] sm:$0xff]
    %v202 = vld [vmem:[#allocation5 + $0x3a8] sm:$0xff]
    %v203 = vld [vmem:[#allocation5 + $0x3b0] sm:$0xff]
    %v204 = vld [vmem:[#allocation5 + $0x3b8] sm:$0xff]
    %v205 = vld [vmem:[#allocation5 + $0x3c0] sm:$0xff]
    %v206 = vld [vmem:[#allocation5 + $0x3c8] sm:$0xff]
    %v207 = vld [vmem:[#allocation5 + $0x3d0] sm:$0xff]
    %v208 = vld [vmem:[#allocation5 + $0x3d8] sm:$0xff]
    %v209 = vld [vmem:[#allocation5 + $0x3e0] sm:$0xff]
    %v210 = vld [vmem:[#allocation5 + $0x3e8] sm:$0xff]
    %v211 = vld [vmem:[#allocation5 + $0x3f0] sm:$0xff]
    %v212 = vld [vmem:[#allocation5 + $0x3f8] sm:$0xff]
    %v213 = vld [vmem:[%s2] sm:$0x3]
    %v215 = vlaneseq
    %v216 = vshrl.u32 %v215, 7
    %v217 = vsub.s32 0, %v216
    %v218 = vrot.slane %v213, %v217
    %v219 = vlaneseq
    %v220 = vshrl.u32 %v219, 7
    %v221 = vsub.s32 1, %v220
    %v222 = vrot.slane %v213, %v221
    %v229 = vunpack.c.l.b16 %v81
    %v230 = vunpack.c.h.b16 %v81
    %v231 = vunpack.c.l.b16 %v82
    %v232 = vunpack.c.h.b16 %v82
    %v233 = vunpack.c.l.b16 %v83
    %v234 = vunpack.c.h.b16 %v83
    %v235 = vunpack.c.l.b16 %v84
    %v236 = vunpack.c.h.b16 %v84
    %v237 = vpack.c.b16 %v229, %v229
    %v238 = vpack.c.b16 %v230, %v230
    %v239 = vpack.c.b16 %v231, %v231
    %v240 = vpack.c.b16 %v232, %v232
    %v241 = vpack.c.b16 %v233, %v233
    %v242 = vpack.c.b16 %v234, %v234
    %v243 = vpack.c.b16 %v235, %v235
    %v244 = vpack.c.b16 %v236, %v236
    %v381 = vunpack.c.l.b16 %v85
    %v382 = vunpack.c.h.b16 %v85
    %v383 = vunpack.c.l.b16 %v86
    %v384 = vunpack.c.h.b16 %v86
    %v385 = vunpack.c.l.b16 %v87
    %v386 = vunpack.c.h.b16 %v87
    %v387 = vunpack.c.l.b16 %v88
    %v388 = vunpack.c.h.b16 %v88
    %v389 = vunpack.c.l.b16 %v89
    %v390 = vunpack.c.h.b16 %v89
    %v391 = vunpack.c.l.b16 %v90
    %v392 = vunpack.c.h.b16 %v90
    %v393 = vunpack.c.l.b16 %v91
    %v394 = vunpack.c.h.b16 %v91
    %v395 = vunpack.c.l.b16 %v92
    %v396 = vunpack.c.h.b16 %v92
    %v397 = vunpack.c.l.b16 %v93
    %v398 = vunpack.c.h.b16 %v93
    %v399 = vunpack.c.l.b16 %v94
    %v400 = vunpack.c.h.b16 %v94
    %v401 = vunpack.c.l.b16 %v95
    %v402 = vunpack.c.h.b16 %v95
    %v403 = vunpack.c.l.b16 %v96
    %v404 = vunpack.c.h.b16 %v96
    %v405 = vunpack.c.l.b16 %v97
    %v406 = vunpack.c.h.b16 %v97
    %v407 = vunpack.c.l.b16 %v98
    %v408 = vunpack.c.h.b16 %v98
    %v409 = vunpack.c.l.b16 %v99
    %v410 = vunpack.c.h.b16 %v99
    %v411 = vunpack.c.l.b16 %v100
    %v412 = vunpack.c.h.b16 %v100
    %v413 = vunpack.c.l.b16 %v101
    %v414 = vunpack.c.h.b16 %v101
    %v415 = vunpack.c.l.b16 %v102
    %v416 = vunpack.c.h.b16 %v102
    %v417 = vunpack.c.l.b16 %v103
    %v418 = vunpack.c.h.b16 %v103
    %v419 = vunpack.c.l.b16 %v104
    %v420 = vunpack.c.h.b16 %v104
    %v421 = vunpack.c.l.b16 %v105
    %v422 = vunpack.c.h.b16 %v105
    %v423 = vunpack.c.l.b16 %v106
    %v424 = vunpack.c.h.b16 %v106
    %v425 = vunpack.c.l.b16 %v107
    %v426 = vunpack.c.h.b16 %v107
    %v427 = vunpack.c.l.b16 %v108
    %v428 = vunpack.c.h.b16 %v108
    %v429 = vunpack.c.l.b16 %v109
    %v430 = vunpack.c.h.b16 %v109
    %v431 = vunpack.c.l.b16 %v110
    %v432 = vunpack.c.h.b16 %v110
    %v433 = vunpack.c.l.b16 %v111
    %v434 = vunpack.c.h.b16 %v111
    %v435 = vunpack.c.l.b16 %v112
    %v436 = vunpack.c.h.b16 %v112
    %v437 = vunpack.c.l.b16 %v113
    %v438 = vunpack.c.h.b16 %v113
    %v439 = vunpack.c.l.b16 %v114
    %v440 = vunpack.c.h.b16 %v114
    %v441 = vunpack.c.l.b16 %v115
    %v442 = vunpack.c.h.b16 %v115
    %v443 = vunpack.c.l.b16 %v116
    %v444 = vunpack.c.h.b16 %v116
    %v445 = vunpack.c.l.b16 %v117
    %v446 = vunpack.c.h.b16 %v117
    %v447 = vunpack.c.l.b16 %v118
    %v448 = vunpack.c.h.b16 %v118
    %v449 = vunpack.c.l.b16 %v119
    %v450 = vunpack.c.h.b16 %v119
    %v451 = vunpack.c.l.b16 %v120
    %v452 = vunpack.c.h.b16 %v120
    %v453 = vunpack.c.l.b16 %v121
    %v454 = vunpack.c.h.b16 %v121
    %v455 = vunpack.c.l.b16 %v122
    %v456 = vunpack.c.h.b16 %v122
    %v457 = vunpack.c.l.b16 %v123
    %v458 = vunpack.c.h.b16 %v123
    %v459 = vunpack.c.l.b16 %v124
    %v460 = vunpack.c.h.b16 %v124
    %v461 = vunpack.c.l.b16 %v125
    %v462 = vunpack.c.h.b16 %v125
    %v463 = vunpack.c.l.b16 %v126
    %v464 = vunpack.c.h.b16 %v126
    %v465 = vunpack.c.l.b16 %v127
    %v466 = vunpack.c.h.b16 %v127
    %v467 = vunpack.c.l.b16 %v128
    %v468 = vunpack.c.h.b16 %v128
    %v469 = vunpack.c.l.b16 %v129
    %v470 = vunpack.c.h.b16 %v129
    %v471 = vunpack.c.l.b16 %v130
    %v472 = vunpack.c.h.b16 %v130
    %v473 = vunpack.c.l.b16 %v131
    %v474 = vunpack.c.h.b16 %v131
    %v475 = vunpack.c.l.b16 %v132
    %v476 = vunpack.c.h.b16 %v132
    %v477 = vunpack.c.l.b16 %v133
    %v478 = vunpack.c.h.b16 %v133
    %v479 = vunpack.c.l.b16 %v134
    %v480 = vunpack.c.h.b16 %v134
    %v481 = vunpack.c.l.b16 %v135
    %v482 = vunpack.c.h.b16 %v135
    %v483 = vunpack.c.l.b16 %v136
    %v484 = vunpack.c.h.b16 %v136
    %v485 = vunpack.c.l.b16 %v137
    %v486 = vunpack.c.h.b16 %v137
    %v487 = vunpack.c.l.b16 %v138
    %v488 = vunpack.c.h.b16 %v138
    %v489 = vunpack.c.l.b16 %v139
    %v490 = vunpack.c.h.b16 %v139
    %v491 = vunpack.c.l.b16 %v140
    %v492 = vunpack.c.h.b16 %v140
    %v493 = vunpack.c.l.b16 %v141
    %v494 = vunpack.c.h.b16 %v141
    %v495 = vunpack.c.l.b16 %v142
    %v496 = vunpack.c.h.b16 %v142
    %v497 = vunpack.c.l.b16 %v143
    %v498 = vunpack.c.h.b16 %v143
    %v499 = vunpack.c.l.b16 %v144
    %v500 = vunpack.c.h.b16 %v144
    %v501 = vunpack.c.l.b16 %v145
    %v502 = vunpack.c.h.b16 %v145
    %v503 = vunpack.c.l.b16 %v146
    %v504 = vunpack.c.h.b16 %v146
    %v505 = vunpack.c.l.b16 %v147
    %v506 = vunpack.c.h.b16 %v147
    %v507 = vunpack.c.l.b16 %v148
    %v508 = vunpack.c.h.b16 %v148
    %v509 = vunpack.c.l.b16 %v149
    %v510 = vunpack.c.h.b16 %v149
    %v511 = vunpack.c.l.b16 %v150
    %v512 = vunpack.c.h.b16 %v150
    %v513 = vunpack.c.l.b16 %v151
    %v514 = vunpack.c.h.b16 %v151
    %v515 = vunpack.c.l.b16 %v152
    %v516 = vunpack.c.h.b16 %v152
    %v517 = vunpack.c.l.b16 %v153
    %v518 = vunpack.c.h.b16 %v153
    %v519 = vunpack.c.l.b16 %v154
    %v520 = vunpack.c.h.b16 %v154
    %v521 = vunpack.c.l.b16 %v155
    %v522 = vunpack.c.h.b16 %v155
    %v523 = vunpack.c.l.b16 %v156
    %v524 = vunpack.c.h.b16 %v156
    %v525 = vunpack.c.l.b16 %v157
    %v526 = vunpack.c.h.b16 %v157
    %v527 = vunpack.c.l.b16 %v158
    %v528 = vunpack.c.h.b16 %v158
    %v529 = vunpack.c.l.b16 %v159
    %v530 = vunpack.c.h.b16 %v159
    %v531 = vunpack.c.l.b16 %v160
    %v532 = vunpack.c.h.b16 %v160
    %v533 = vunpack.c.l.b16 %v161
    %v534 = vunpack.c.h.b16 %v161
    %v535 = vunpack.c.l.b16 %v162
    %v536 = vunpack.c.h.b16 %v162
    %v537 = vunpack.c.l.b16 %v163
    %v538 = vunpack.c.h.b16 %v163
    %v539 = vunpack.c.l.b16 %v164
    %v540 = vunpack.c.h.b16 %v164
    %v541 = vunpack.c.l.b16 %v165
    %v542 = vunpack.c.h.b16 %v165
    %v543 = vunpack.c.l.b16 %v166
    %v544 = vunpack.c.h.b16 %v166
    %v545 = vunpack.c.l.b16 %v167
    %v546 = vunpack.c.h.b16 %v167
    %v547 = vunpack.c.l.b16 %v168
    %v548 = vunpack.c.h.b16 %v168
    %v549 = vunpack.c.l.b16 %v169
    %v550 = vunpack.c.h.b16 %v169
    %v551 = vunpack.c.l.b16 %v170
    %v552 = vunpack.c.h.b16 %v170
    %v553 = vunpack.c.l.b16 %v171
    %v554 = vunpack.c.h.b16 %v171
    %v555 = vunpack.c.l.b16 %v172
    %v556 = vunpack.c.h.b16 %v172
    %v557 = vunpack.c.l.b16 %v173
    %v558 = vunpack.c.h.b16 %v173
    %v559 = vunpack.c.l.b16 %v174
    %v560 = vunpack.c.h.b16 %v174
    %v561 = vunpack.c.l.b16 %v175
    %v562 = vunpack.c.h.b16 %v175
    %v563 = vunpack.c.l.b16 %v176
    %v564 = vunpack.c.h.b16 %v176
    %v565 = vunpack.c.l.b16 %v177
    %v566 = vunpack.c.h.b16 %v177
    %v567 = vunpack.c.l.b16 %v178
    %v568 = vunpack.c.h.b16 %v178
    %v569 = vunpack.c.l.b16 %v179
    %v570 = vunpack.c.h.b16 %v179
    %v571 = vunpack.c.l.b16 %v180
    %v572 = vunpack.c.h.b16 %v180
    %v573 = vunpack.c.l.b16 %v181
    %v574 = vunpack.c.h.b16 %v181
    %v575 = vunpack.c.l.b16 %v182
    %v576 = vunpack.c.h.b16 %v182
    %v577 = vunpack.c.l.b16 %v183
    %v578 = vunpack.c.h.b16 %v183
    %v579 = vunpack.c.l.b16 %v184
    %v580 = vunpack.c.h.b16 %v184
    %v581 = vunpack.c.l.b16 %v185
    %v582 = vunpack.c.h.b16 %v185
    %v583 = vunpack.c.l.b16 %v186
    %v584 = vunpack.c.h.b16 %v186
    %v585 = vunpack.c.l.b16 %v187
    %v586 = vunpack.c.h.b16 %v187
    %v587 = vunpack.c.l.b16 %v188
    %v588 = vunpack.c.h.b16 %v188
    %v589 = vunpack.c.l.b16 %v189
    %v590 = vunpack.c.h.b16 %v189
    %v591 = vunpack.c.l.b16 %v190
    %v592 = vunpack.c.h.b16 %v190
    %v593 = vunpack.c.l.b16 %v191
    %v594 = vunpack.c.h.b16 %v191
    %v595 = vunpack.c.l.b16 %v192
    %v596 = vunpack.c.h.b16 %v192
    %v597 = vunpack.c.l.b16 %v193
    %v598 = vunpack.c.h.b16 %v193
    %v599 = vunpack.c.l.b16 %v194
    %v600 = vunpack.c.h.b16 %v194
    %v601 = vunpack.c.l.b16 %v195
    %v602 = vunpack.c.h.b16 %v195
    %v603 = vunpack.c.l.b16 %v196
    %v604 = vunpack.c.h.b16 %v196
    %v605 = vunpack.c.l.b16 %v197
    %v606 = vunpack.c.h.b16 %v197
    %v607 = vunpack.c.l.b16 %v198
    %v608 = vunpack.c.h.b16 %v198
    %v609 = vunpack.c.l.b16 %v199
    %v610 = vunpack.c.h.b16 %v199
    %v611 = vunpack.c.l.b16 %v200
    %v612 = vunpack.c.h.b16 %v200
    %v613 = vunpack.c.l.b16 %v201
    %v614 = vunpack.c.h.b16 %v201
    %v615 = vunpack.c.l.b16 %v202
    %v616 = vunpack.c.h.b16 %v202
    %v617 = vunpack.c.l.b16 %v203
    %v618 = vunpack.c.h.b16 %v203
    %v619 = vunpack.c.l.b16 %v204
    %v620 = vunpack.c.h.b16 %v204
    %v621 = vunpack.c.l.b16 %v205
    %v622 = vunpack.c.h.b16 %v205
    %v623 = vunpack.c.l.b16 %v206
    %v624 = vunpack.c.h.b16 %v206
    %v625 = vunpack.c.l.b16 %v207
    %v626 = vunpack.c.h.b16 %v207
    %v627 = vunpack.c.l.b16 %v208
    %v628 = vunpack.c.h.b16 %v208
    %v629 = vunpack.c.l.b16 %v209
    %v630 = vunpack.c.h.b16 %v209
    %v631 = vunpack.c.l.b16 %v210
    %v632 = vunpack.c.h.b16 %v210
    %v633 = vunpack.c.l.b16 %v211
    %v634 = vunpack.c.h.b16 %v211
    %v635 = vunpack.c.l.b16 %v212
    %v636 = vunpack.c.h.b16 %v212
    %v637 = vpack.c.b16 %v383, %v381
    %v638 = vpack.c.b16 %v384, %v382
    %v639 = vpack.c.b16 %v387, %v385
    %v640 = vpack.c.b16 %v388, %v386
    %v641 = vpack.c.b16 %v391, %v389
    %v642 = vpack.c.b16 %v392, %v390
    %v643 = vpack.c.b16 %v395, %v393
    %v644 = vpack.c.b16 %v396, %v394
    %v645 = vpack.c.b16 %v399, %v397
    %v646 = vpack.c.b16 %v400, %v398
    %v647 = vpack.c.b16 %v403, %v401
    %v648 = vpack.c.b16 %v404, %v402
    %v649 = vpack.c.b16 %v407, %v405
    %v650 = vpack.c.b16 %v408, %v406
    %v651 = vpack.c.b16 %v411, %v409
    %v652 = vpack.c.b16 %v412, %v410
    %v653 = vpack.c.b16 %v415, %v413
    %v654 = vpack.c.b16 %v416, %v414
    %v655 = vpack.c.b16 %v419, %v417
    %v656 = vpack.c.b16 %v420, %v418
    %v657 = vpack.c.b16 %v423, %v421
    %v658 = vpack.c.b16 %v424, %v422
    %v659 = vpack.c.b16 %v427, %v425
    %v660 = vpack.c.b16 %v428, %v426
    %v661 = vpack.c.b16 %v431, %v429
    %v662 = vpack.c.b16 %v432, %v430
    %v663 = vpack.c.b16 %v435, %v433
    %v664 = vpack.c.b16 %v436, %v434
    %v665 = vpack.c.b16 %v439, %v437
    %v666 = vpack.c.b16 %v440, %v438
    %v667 = vpack.c.b16 %v443, %v441
    %v668 = vpack.c.b16 %v444, %v442
    %v669 = vpack.c.b16 %v447, %v445
    %v670 = vpack.c.b16 %v448, %v446
    %v671 = vpack.c.b16 %v451, %v449
    %v672 = vpack.c.b16 %v452, %v450
    %v673 = vpack.c.b16 %v455, %v453
    %v674 = vpack.c.b16 %v456, %v454
    %v675 = vpack.c.b16 %v459, %v457
    %v676 = vpack.c.b16 %v460, %v458
    %v677 = vpack.c.b16 %v463, %v461
    %v678 = vpack.c.b16 %v464, %v462
    %v679 = vpack.c.b16 %v467, %v465
    %v680 = vpack.c.b16 %v468, %v466
    %v681 = vpack.c.b16 %v471, %v469
    %v682 = vpack.c.b16 %v472, %v470
    %v683 = vpack.c.b16 %v475, %v473
    %v684 = vpack.c.b16 %v476, %v474
    %v685 = vpack.c.b16 %v479, %v477
    %v686 = vpack.c.b16 %v480, %v478
    %v687 = vpack.c.b16 %v483, %v481
    %v688 = vpack.c.b16 %v484, %v482
    %v689 = vpack.c.b16 %v487, %v485
    %v690 = vpack.c.b16 %v488, %v486
    %v691 = vpack.c.b16 %v491, %v489
    %v692 = vpack.c.b16 %v492, %v490
    %v693 = vpack.c.b16 %v495, %v493
    %v694 = vpack.c.b16 %v496, %v494
    %v695 = vpack.c.b16 %v499, %v497
    %v696 = vpack.c.b16 %v500, %v498
    %v697 = vpack.c.b16 %v503, %v501
    %v698 = vpack.c.b16 %v504, %v502
    %v699 = vpack.c.b16 %v507, %v505
    %v700 = vpack.c.b16 %v508, %v506
    %v701 = vpack.c.b16 %v511, %v509
    %v702 = vpack.c.b16 %v512, %v510
    %v703 = vpack.c.b16 %v515, %v513
    %v704 = vpack.c.b16 %v516, %v514
    %v705 = vpack.c.b16 %v519, %v517
    %v706 = vpack.c.b16 %v520, %v518
    %v707 = vpack.c.b16 %v523, %v521
    %v708 = vpack.c.b16 %v524, %v522
    %v709 = vpack.c.b16 %v527, %v525
    %v710 = vpack.c.b16 %v528, %v526
    %v711 = vpack.c.b16 %v531, %v529
    %v712 = vpack.c.b16 %v532, %v530
    %v713 = vpack.c.b16 %v535, %v533
    %v714 = vpack.c.b16 %v536, %v534
    %v715 = vpack.c.b16 %v539, %v537
    %v716 = vpack.c.b16 %v540, %v538
    %v717 = vpack.c.b16 %v543, %v541
    %v718 = vpack.c.b16 %v544, %v542
    %v719 = vpack.c.b16 %v547, %v545
    %v720 = vpack.c.b16 %v548, %v546
    %v721 = vpack.c.b16 %v551, %v549
    %v722 = vpack.c.b16 %v552, %v550
    %v723 = vpack.c.b16 %v555, %v553
    %v724 = vpack.c.b16 %v556, %v554
    %v725 = vpack.c.b16 %v559, %v557
    %v726 = vpack.c.b16 %v560, %v558
    %v727 = vpack.c.b16 %v563, %v561
    %v728 = vpack.c.b16 %v564, %v562
    %v729 = vpack.c.b16 %v567, %v565
    %v730 = vpack.c.b16 %v568, %v566
    %v731 = vpack.c.b16 %v571, %v569
    %v732 = vpack.c.b16 %v572, %v570
    %v733 = vpack.c.b16 %v575, %v573
    %v734 = vpack.c.b16 %v576, %v574
    %v735 = vpack.c.b16 %v579, %v577
    %v736 = vpack.c.b16 %v580, %v578
    %v737 = vpack.c.b16 %v583, %v581
    %v738 = vpack.c.b16 %v584, %v582
    %v739 = vpack.c.b16 %v587, %v585
    %v740 = vpack.c.b16 %v588, %v586
    %v741 = vpack.c.b16 %v591, %v589
    %v742 = vpack.c.b16 %v592, %v590
    %v743 = vpack.c.b16 %v595, %v593
    %v744 = vpack.c.b16 %v596, %v594
    %v745 = vpack.c.b16 %v599, %v597
    %v746 = vpack.c.b16 %v600, %v598
    %v747 = vpack.c.b16 %v603, %v601
    %v748 = vpack.c.b16 %v604, %v602
    %v749 = vpack.c.b16 %v607, %v605
    %v750 = vpack.c.b16 %v608, %v606
    %v751 = vpack.c.b16 %v611, %v609
    %v752 = vpack.c.b16 %v612, %v610
    %v753 = vpack.c.b16 %v615, %v613
    %v754 = vpack.c.b16 %v616, %v614
    %v755 = vpack.c.b16 %v619, %v617
    %v756 = vpack.c.b16 %v620, %v618
    %v757 = vpack.c.b16 %v623, %v621
    %v758 = vpack.c.b16 %v624, %v622
    %v759 = vpack.c.b16 %v627, %v625
    %v760 = vpack.c.b16 %v628, %v626
    %v761 = vpack.c.b16 %v631, %v629
    %v762 = vpack.c.b16 %v632, %v630
    %v763 = vpack.c.b16 %v635, %v633
    %v764 = vpack.c.b16 %v636, %v634
    %893 = vmatprep.subr.bf16.mxu0 %v652
    %894 = vmatpush1.bf16.msra.mxu0 %v651
    %895 = vmatprep.subr.bf16.mxu0 %v650
    %896 = vmatpush1.bf16.msra.mxu0 %v649
    %897 = vmatprep.subr.bf16.mxu0 %v648
    %898 = vmatpush1.bf16.msra.mxu0 %v647
    %899 = vmatprep.subr.bf16.mxu0 %v646
    %900 = vmatpush1.bf16.msra.mxu0 %v645
    %901 = vmatprep.subr.bf16.mxu0 %v644
    %902 = vmatpush1.bf16.msra.mxu0 %v643
    %903 = vmatprep.subr.bf16.mxu0 %v642
    %904 = vmatpush1.bf16.msra.mxu0 %v641
    %905 = vmatprep.subr.bf16.mxu0 %v640
    %906 = vmatpush1.bf16.msra.mxu0 %v639
    %907 = vmatprep.subr.bf16.mxu0 %v638
    %908 = vmatpush1.bf16.msra.mxu0 %v637
    %909 = vmatprep.subr.bf16.mxu0 %v668
    %910 = vmatpush2.bf16.msra.mxu0 %v667
    %911 = vmatprep.subr.bf16.mxu0 %v666
    %912 = vmatpush2.bf16.msra.mxu0 %v665
    %913 = vmatprep.subr.bf16.mxu0 %v664
    %914 = vmatpush2.bf16.msra.mxu0 %v663
    %915 = vmatprep.subr.bf16.mxu0 %v662
    %916 = vmatpush2.bf16.msra.mxu0 %v661
    %917 = vmatprep.subr.bf16.mxu0 %v660
    %918 = vmatpush2.bf16.msra.mxu0 %v659
    %919 = vmatprep.subr.bf16.mxu0 %v658
    %920 = vmatpush2.bf16.msra.mxu0 %v657
    %921 = vmatprep.subr.bf16.mxu0 %v656
    %922 = vmatpush2.bf16.msra.mxu0 %v655
    %923 = vmatprep.subr.bf16.mxu0 %v654
    %924 = vmatpush2.bf16.msra.mxu0 %v653
    %925 = vmatprep.mubr.bf16.mxu0 %v238
    %926 = vmatmul.mubr.bf16.gmra.mxu0 %v237
    %v927 = vpop.f32.mrf.mxu0
    %v928 = vadd.f32 %v218, %v927
    %v929 = vpop.f32.mrf.mxu0
    %v930 = vadd.f32 %v222, %v929
    %v931 = vpop.f32.mrf.mxu0
    %v932 = vpop.f32.mrf.mxu0
    %933 = vdwg.mxu0
    %934 = vmatprep.subr.bf16.mxu0 %v684
    %935 = vmatpush1.bf16.msra.mxu0 %v683
    %936 = vmatprep.subr.bf16.mxu0 %v682
    %937 = vmatpush1.bf16.msra.mxu0 %v681
    %938 = vmatprep.subr.bf16.mxu0 %v680
    %939 = vmatpush1.bf16.msra.mxu0 %v679
    %940 = vmatprep.subr.bf16.mxu0 %v678
    %941 = vmatpush1.bf16.msra.mxu0 %v677
    %942 = vmatprep.subr.bf16.mxu0 %v676
    %943 = vmatpush1.bf16.msra.mxu0 %v675
    %944 = vmatprep.subr.bf16.mxu0 %v674
    %945 = vmatpush1.bf16.msra.mxu0 %v673
    %946 = vmatprep.subr.bf16.mxu0 %v672
    %947 = vmatpush1.bf16.msra.mxu0 %v671
    %948 = vmatprep.subr.bf16.mxu0 %v670
    %949 = vmatpush1.bf16.msra.mxu0 %v669
    %950 = vmatprep.subr.bf16.mxu0 %v700
    %951 = vmatpush2.bf16.msra.mxu0 %v699
    %952 = vmatprep.subr.bf16.mxu0 %v698
    %953 = vmatpush2.bf16.msra.mxu0 %v697
    %954 = vmatprep.subr.bf16.mxu0 %v696
    %955 = vmatpush2.bf16.msra.mxu0 %v695
    %956 = vmatprep.subr.bf16.mxu0 %v694
    %957 = vmatpush2.bf16.msra.mxu0 %v693
    %958 = vmatprep.subr.bf16.mxu0 %v692
    %959 = vmatpush2.bf16.msra.mxu0 %v691
    %960 = vmatprep.subr.bf16.mxu0 %v690
    %961 = vmatpush2.bf16.msra.mxu0 %v689
    %962 = vmatprep.subr.bf16.mxu0 %v688
    %963 = vmatpush2.bf16.msra.mxu0 %v687
    %964 = vmatprep.subr.bf16.mxu0 %v686
    %965 = vmatpush2.bf16.msra.mxu0 %v685
    %966 = vmatprep.mubr.bf16.mxu0 %v240
    %967 = vmatmul.mubr.bf16.gmra.mxu0 %v239
    %v968 = vpop.f32.mrf.mxu0
    %v969 = vadd.f32 %v928, %v968
    %v970 = vpop.f32.mrf.mxu0
    %v971 = vadd.f32 %v930, %v970
    %v972 = vpop.f32.mrf.mxu0
    %v973 = vpop.f32.mrf.mxu0
    %974 = vdwg.mxu0
    %975 = vmatprep.subr.bf16.mxu0 %v716
    %976 = vmatpush1.bf16.msra.mxu0 %v715
    %977 = vmatprep.subr.bf16.mxu0 %v714
    %978 = vmatpush1.bf16.msra.mxu0 %v713
    %979 = vmatprep.subr.bf16.mxu0 %v712
    %980 = vmatpush1.bf16.msra.mxu0 %v711
    %981 = vmatprep.subr.bf16.mxu0 %v710
    %982 = vmatpush1.bf16.msra.mxu0 %v709
    %983 = vmatprep.subr.bf16.mxu0 %v708
    %984 = vmatpush1.bf16.msra.mxu0 %v707
    %985 = vmatprep.subr.bf16.mxu0 %v706
    %986 = vmatpush1.bf16.msra.mxu0 %v705
    %987 = vmatprep.subr.bf16.mxu0 %v704
    %988 = vmatpush1.bf16.msra.mxu0 %v703
    %989 = vmatprep.subr.bf16.mxu0 %v702
    %990 = vmatpush1.bf16.msra.mxu0 %v701
    %991 = vmatprep.subr.bf16.mxu0 %v732
    %992 = vmatpush2.bf16.msra.mxu0 %v731
    %993 = vmatprep.subr.bf16.mxu0 %v730
    %994 = vmatpush2.bf16.msra.mxu0 %v729
    %995 = vmatprep.subr.bf16.mxu0 %v728
    %996 = vmatpush2.bf16.msra.mxu0 %v727
    %997 = vmatprep.subr.bf16.mxu0 %v726
    %998 = vmatpush2.bf16.msra.mxu0 %v725
    %999 = vmatprep.subr.bf16.mxu0 %v724
    %1000 = vmatpush2.bf16.msra.mxu0 %v723
    %1001 = vmatprep.subr.bf16.mxu0 %v722
    %1002 = vmatpush2.bf16.msra.mxu0 %v721
    %1003 = vmatprep.subr.bf16.mxu0 %v720
    %1004 = vmatpush2.bf16.msra.mxu0 %v719
    %1005 = vmatprep.subr.bf16.mxu0 %v718
    %1006 = vmatpush2.bf16.msra.mxu0 %v717
    %1007 = vmatprep.mubr.bf16.mxu0 %v242
    %1008 = vmatmul.mubr.bf16.gmra.mxu0 %v241
    %v1009 = vpop.f32.mrf.mxu0
    %v1010 = vadd.f32 %v969, %v1009
    %v1011 = vpop.f32.mrf.mxu0
    %v1012 = vadd.f32 %v971, %v1011
    %v1013 = vpop.f32.mrf.mxu0
    %v1014 = vpop.f32.mrf.mxu0
    %1015 = vdwg.mxu0
    %1016 = vmatprep.subr.bf16.mxu0 %v748
    %1017 = vmatpush1.bf16.msra.mxu0 %v747
    %1018 = vmatprep.subr.bf16.mxu0 %v746
    %1019 = vmatpush1.bf16.msra.mxu0 %v745
    %1020 = vmatprep.subr.bf16.mxu0 %v744
    %1021 = vmatpush1.bf16.msra.mxu0 %v743
    %1022 = vmatprep.subr.bf16.mxu0 %v742
    %1023 = vmatpush1.bf16.msra.mxu0 %v741
    %1024 = vmatprep.subr.bf16.mxu0 %v740
    %1025 = vmatpush1.bf16.msra.mxu0 %v739
    %1026 = vmatprep.subr.bf16.mxu0 %v738
    %1027 = vmatpush1.bf16.msra.mxu0 %v737
    %1028 = vmatprep.subr.bf16.mxu0 %v736
    %1029 = vmatpush1.bf16.msra.mxu0 %v735
    %1030 = vmatprep.subr.bf16.mxu0 %v734
    %1031 = vmatpush1.bf16.msra.mxu0 %v733
    %1032 = vmatprep.subr.bf16.mxu0 %v764
    %1033 = vmatpush2.bf16.msra.mxu0 %v763
    %1034 = vmatprep.subr.bf16.mxu0 %v762
    %1035 = vmatpush2.bf16.msra.mxu0 %v761
    %1036 = vmatprep.subr.bf16.mxu0 %v760
    %1037 = vmatpush2.bf16.msra.mxu0 %v759
    %1038 = vmatprep.subr.bf16.mxu0 %v758
    %1039 = vmatpush2.bf16.msra.mxu0 %v757
    %1040 = vmatprep.subr.bf16.mxu0 %v756
    %1041 = vmatpush2.bf16.msra.mxu0 %v755
    %1042 = vmatprep.subr.bf16.mxu0 %v754
    %1043 = vmatpush2.bf16.msra.mxu0 %v753
    %1044 = vmatprep.subr.bf16.mxu0 %v752
    %1045 = vmatpush2.bf16.msra.mxu0 %v751
    %1046 = vmatprep.subr.bf16.mxu0 %v750
    %1047 = vmatpush2.bf16.msra.mxu0 %v749
    %1048 = vmatprep.mubr.bf16.mxu0 %v244
    %1049 = vmatmul.mubr.bf16.gmra.mxu0 %v243
    %v1050 = vpop.f32.mrf.mxu0
    %v1051 = vadd.f32 %v1010, %v1050
    %v1052 = vpop.f32.mrf.mxu0
    %v1053 = vadd.f32 %v1012, %v1052
    %v1054 = vpop.f32.mrf.mxu0
    %v1055 = vpop.f32.mrf.mxu0
    %1056 = vdwg.mxu0
    %v1057 = vmax.f32 %v1051, 0.0
    %v1058 = vmax.f32 %v1053, 0.0
    %v1059 = vpack.c.bf16 %v1057, %v1057
    %v1060 = vpack.c.bf16 %v1058, %v1058
    %v1061 = vld [vmem:[#allocation7] sm:$0xf]
    %v1062 = vld [vmem:[#allocation7 + $0x4] sm:$0xf]
    %v1063 = vld [vmem:[#allocation7 + $0x8] sm:$0xf]
    %v1064 = vld [vmem:[#allocation7 + $0xc] sm:$0xf]
    %v1065 = vld [vmem:[#allocation7 + $0x10] sm:$0xf]
    %v1066 = vld [vmem:[#allocation7 + $0x14] sm:$0xf]
    %v1067 = vld [vmem:[#allocation7 + $0x18] sm:$0xf]
    %v1068 = vld [vmem:[#allocation7 + $0x1c] sm:$0xf]
    %v1069 = vld [vmem:[#allocation7 + $0x20] sm:$0xf]
    %v1070 = vld [vmem:[#allocation7 + $0x24] sm:$0xf]
    %v1071 = vld [vmem:[#allocation7 + $0x28] sm:$0xf]
    %v1072 = vld [vmem:[#allocation7 + $0x2c] sm:$0xf]
    %v1073 = vld [vmem:[#allocation7 + $0x30] sm:$0xf]
    %v1074 = vld [vmem:[#allocation7 + $0x34] sm:$0xf]
    %v1075 = vld [vmem:[#allocation7 + $0x38] sm:$0xf]
    %v1076 = vld [vmem:[#allocation7 + $0x3c] sm:$0xf]
    %v1077 = vld [vmem:[#allocation7 + $0x40] sm:$0xf]
    %v1078 = vld [vmem:[#allocation7 + $0x44] sm:$0xf]
    %v1079 = vld [vmem:[#allocation7 + $0x48] sm:$0xf]
    %v1080 = vld [vmem:[#allocation7 + $0x4c] sm:$0xf]
    %v1081 = vld [vmem:[#allocation7 + $0x50] sm:$0xf]
    %v1082 = vld [vmem:[#allocation7 + $0x54] sm:$0xf]
    %v1083 = vld [vmem:[#allocation7 + $0x58] sm:$0xf]
    %v1084 = vld [vmem:[#allocation7 + $0x5c] sm:$0xf]
    %v1085 = vld [vmem:[#allocation7 + $0x60] sm:$0xf]
    %v1086 = vld [vmem:[#allocation7 + $0x64] sm:$0xf]
    %v1087 = vld [vmem:[#allocation7 + $0x68] sm:$0xf]
    %v1088 = vld [vmem:[#allocation7 + $0x6c] sm:$0xf]
    %v1089 = vld [vmem:[#allocation7 + $0x70] sm:$0xf]
    %v1090 = vld [vmem:[#allocation7 + $0x74] sm:$0xf]
    %v1091 = vld [vmem:[#allocation7 + $0x78] sm:$0xf]
    %v1092 = vld [vmem:[#allocation7 + $0x7c] sm:$0xf]
    %v1093 = vld [vmem:[%s4] sm:$0x1]
    %v1095 = vlaneseq
    %v1096 = vshrl.u32 %v1095, 7
    %v1097 = vsub.s32 0, %v1096
    %v1098 = vrot.slane %v1093, %v1097
    %v1132 = vunpack.c.l.b16 %v1061
    %v1133 = vunpack.c.l.b16 %v1062
    %v1134 = vunpack.c.l.b16 %v1063
    %v1135 = vunpack.c.l.b16 %v1064
    %v1136 = vunpack.c.l.b16 %v1065
    %v1137 = vunpack.c.l.b16 %v1066
    %v1138 = vunpack.c.l.b16 %v1067
    %v1139 = vunpack.c.l.b16 %v1068
    %v1140 = vunpack.c.l.b16 %v1069
    %v1141 = vunpack.c.l.b16 %v1070
    %v1142 = vunpack.c.l.b16 %v1071
    %v1143 = vunpack.c.l.b16 %v1072
    %v1144 = vunpack.c.l.b16 %v1073
    %v1145 = vunpack.c.l.b16 %v1074
    %v1146 = vunpack.c.l.b16 %v1075
    %v1147 = vunpack.c.l.b16 %v1076
    %v1148 = vunpack.c.l.b16 %v1077
    %v1149 = vunpack.c.l.b16 %v1078
    %v1150 = vunpack.c.l.b16 %v1079
    %v1151 = vunpack.c.l.b16 %v1080
    %v1152 = vunpack.c.l.b16 %v1081
    %v1153 = vunpack.c.l.b16 %v1082
    %v1154 = vunpack.c.l.b16 %v1083
    %v1155 = vunpack.c.l.b16 %v1084
    %v1156 = vunpack.c.l.b16 %v1085
    %v1157 = vunpack.c.l.b16 %v1086
    %v1158 = vunpack.c.l.b16 %v1087
    %v1159 = vunpack.c.l.b16 %v1088
    %v1160 = vunpack.c.l.b16 %v1089
    %v1161 = vunpack.c.l.b16 %v1090
    %v1162 = vunpack.c.l.b16 %v1091
    %v1163 = vunpack.c.l.b16 %v1092
    %v1164 = vpack.c.b16 %v1133, %v1132
    %v1165 = vpack.c.b16 %v1135, %v1134
    %v1166 = vpack.c.b16 %v1137, %v1136
    %v1167 = vpack.c.b16 %v1139, %v1138
    %v1168 = vpack.c.b16 %v1141, %v1140
    %v1169 = vpack.c.b16 %v1143, %v1142
    %v1170 = vpack.c.b16 %v1145, %v1144
    %v1171 = vpack.c.b16 %v1147, %v1146
    %v1172 = vpack.c.b16 %v1149, %v1148
    %v1173 = vpack.c.b16 %v1151, %v1150
    %v1174 = vpack.c.b16 %v1153, %v1152
    %v1175 = vpack.c.b16 %v1155, %v1154
    %v1176 = vpack.c.b16 %v1157, %v1156
    %v1177 = vpack.c.b16 %v1159, %v1158
    %v1178 = vpack.c.b16 %v1161, %v1160
    %v1179 = vpack.c.b16 %v1163, %v1162
    %1196 = vmatprep.subr.bf16.mxu0 0
    %1197 = vmatpush1.bf16.msra.mxu0 %v1171
    %1198 = vmatprep.subr.bf16.mxu0 0
    %1199 = vmatpush1.bf16.msra.mxu0 %v1170
    %1200 = vmatprep.subr.bf16.mxu0 0
    %1201 = vmatpush1.bf16.msra.mxu0 %v1169
    %1202 = vmatprep.subr.bf16.mxu0 0
    %1203 = vmatpush1.bf16.msra.mxu0 %v1168
    %1204 = vmatprep.subr.bf16.mxu0 0
    %1205 = vmatpush1.bf16.msra.mxu0 %v1167
    %1206 = vmatprep.subr.bf16.mxu0 0
    %1207 = vmatpush1.bf16.msra.mxu0 %v1166
    %1208 = vmatprep.subr.bf16.mxu0 0
    %1209 = vmatpush1.bf16.msra.mxu0 %v1165
    %1210 = vmatprep.subr.bf16.mxu0 0
    %1211 = vmatpush1.bf16.msra.mxu0 %v1164
    %1212 = vmatprep.subr.bf16.mxu0 0
    %1213 = vmatpush2.bf16.msra.mxu0 %v1179
    %1214 = vmatprep.subr.bf16.mxu0 0
    %1215 = vmatpush2.bf16.msra.mxu0 %v1178
    %1216 = vmatprep.subr.bf16.mxu0 0
    %1217 = vmatpush2.bf16.msra.mxu0 %v1177
    %1218 = vmatprep.subr.bf16.mxu0 0
    %1219 = vmatpush2.bf16.msra.mxu0 %v1176
    %1220 = vmatprep.subr.bf16.mxu0 0
    %1221 = vmatpush2.bf16.msra.mxu0 %v1175
    %1222 = vmatprep.subr.bf16.mxu0 0
    %1223 = vmatpush2.bf16.msra.mxu0 %v1174
    %1224 = vmatprep.subr.bf16.mxu0 0
    %1225 = vmatpush2.bf16.msra.mxu0 %v1173
    %1226 = vmatprep.subr.bf16.mxu0 0
    %1227 = vmatpush2.bf16.msra.mxu0 %v1172
    %1228 = vmatprep.mubr.bf16.mxu0 %v1060
    %1229 = vmatmul.mubr.bf16.gmra.mxu0 %v1059
    %v1230 = vpop.f32.mrf.mxu0
    %v1231 = vadd.f32 %v1098, %v1230
    %v1232 = vpop.f32.mrf.mxu0
    %v1233 = vpop.f32.mrf.mxu0
    %v1234 = vpop.f32.mrf.mxu0
    %1235 = vdwg.mxu0
    %v1236 = vmax.f32 %v1231, 0.0
    %v1237 = vpack.c.bf16 %v1236, %v1236
    %v1238 = vld [vmem:[#allocation8] sm:$0xf]
    %v1239 = vld [vmem:[#allocation8 + $0x4] sm:$0xf]
    %v1240 = vld [vmem:[#allocation8 + $0x8] sm:$0xf]
    %v1241 = vld [vmem:[#allocation8 + $0xc] sm:$0xf]
    %v1242 = vld [vmem:[#allocation8 + $0x10] sm:$0xf]
    %v1243 = vld [vmem:[#allocation8 + $0x14] sm:$0xf]
    %v1244 = vld [vmem:[#allocation8 + $0x18] sm:$0xf]
    %v1245 = vld [vmem:[#allocation8 + $0x1c] sm:$0xf]
    %v1246 = vld [vmem:[#allocation8 + $0x20] sm:$0xf]
    %v1247 = vld [vmem:[#allocation8 + $0x24] sm:$0xf]
    %v1248 = vld [vmem:[#allocation8 + $0x28] sm:$0xf]
    %v1249 = vld [vmem:[#allocation8 + $0x2c] sm:$0xf]
    %v1250 = vld [vmem:[#allocation8 + $0x30] sm:$0xf]
    %v1251 = vld [vmem:[#allocation8 + $0x34] sm:$0xf]
    %v1252 = vld [vmem:[#allocation8 + $0x38] sm:$0xf]
    %v1253 = vld [vmem:[#allocation8 + $0x3c] sm:$0xf]
    %v1254 = vld [vmem:[%s6] sm:$0x1]
    %v1256 = vlaneseq
    %v1257 = vshrl.u32 %v1256, 7
    %v1258 = vsub.s32 0, %v1257
    %v1259 = vrot.slane %v1254, %v1258
    %v1277 = vunpack.c.l.b16 %v1238
    %v1278 = vunpack.c.l.b16 %v1239
    %v1279 = vunpack.c.l.b16 %v1240
    %v1280 = vunpack.c.l.b16 %v1241
    %v1281 = vunpack.c.l.b16 %v1242
    %v1282 = vunpack.c.l.b16 %v1243
    %v1283 = vunpack.c.l.b16 %v1244
    %v1284 = vunpack.c.l.b16 %v1245
    %v1285 = vunpack.c.l.b16 %v1246
    %v1286 = vunpack.c.l.b16 %v1247
    %v1287 = vunpack.c.l.b16 %v1248
    %v1288 = vunpack.c.l.b16 %v1249
    %v1289 = vunpack.c.l.b16 %v1250
    %v1290 = vunpack.c.l.b16 %v1251
    %v1291 = vunpack.c.l.b16 %v1252
    %v1292 = vunpack.c.l.b16 %v1253
    %v1293 = vpack.c.b16 %v1278, %v1277
    %v1294 = vpack.c.b16 %v1280, %v1279
    %v1295 = vpack.c.b16 %v1282, %v1281
    %v1296 = vpack.c.b16 %v1284, %v1283
    %v1297 = vpack.c.b16 %v1286, %v1285
    %v1298 = vpack.c.b16 %v1288, %v1287
    %v1299 = vpack.c.b16 %v1290, %v1289
    %v1300 = vpack.c.b16 %v1292, %v1291
    %1309 = vmatprep.subr.bf16.mxu0 0
    %1310 = vmatpush1.bf16.msra.mxu0 %v1300
    %1311 = vmatprep.subr.bf16.mxu0 0
    %1312 = vmatpush1.bf16.msra.mxu0 %v1299
    %1313 = vmatprep.subr.bf16.mxu0 0
    %1314 = vmatpush1.bf16.msra.mxu0 %v1298
    %1315 = vmatprep.subr.bf16.mxu0 0
    %1316 = vmatpush1.bf16.msra.mxu0 %v1297
    %1317 = vmatprep.subr.bf16.mxu0 0
    %1318 = vmatpush1.bf16.msra.mxu0 %v1296
    %1319 = vmatprep.subr.bf16.mxu0 0
    %1320 = vmatpush1.bf16.msra.mxu0 %v1295
    %1321 = vmatprep.subr.bf16.mxu0 0
    %1322 = vmatpush1.bf16.msra.mxu0 %v1294
    %1323 = vmatprep.subr.bf16.mxu0 0
    %1324 = vmatpush1.bf16.msra.mxu0 %v1293
    %1325 = vmatprep.subr.bf16.mxu0 0
    %1326 = vmatpush2.bf16.msra.mxu0 0
    %1327 = vmatprep.subr.bf16.mxu0 0
    %1328 = vmatpush2.bf16.msra.mxu0 0
    %1329 = vmatprep.subr.bf16.mxu0 0
    %1330 = vmatpush2.bf16.msra.mxu0 0
    %1331 = vmatprep.subr.bf16.mxu0 0
    %1332 = vmatpush2.bf16.msra.mxu0 0
    %1333 = vmatprep.subr.bf16.mxu0 0
    %1334 = vmatpush2.bf16.msra.mxu0 0
    %1335 = vmatprep.subr.bf16.mxu0 0
    %1336 = vmatpush2.bf16.msra.mxu0 0
    %1337 = vmatprep.subr.bf16.mxu0 0
    %1338 = vmatpush2.bf16.msra.mxu0 0
    %1339 = vmatprep.subr.bf16.mxu0 0
    %1340 = vmatpush2.bf16.msra.mxu0 0
    %1341 = vmatprep.mubr.bf16.mxu0 0
    %1342 = vmatmul.mubr.bf16.gmra.mxu0 %v1237
    %v1343 = vpop.f32.mrf.mxu0
    %v1344 = vadd.f32 %v1259, %v1343
    %v1345 = vpop.f32.mrf.mxu0
    %v1346 = vpop.f32.mrf.mxu0
    %v1347 = vpop.f32.mrf.mxu0
    %1348 = vdwg.mxu0
    %1349 = vst [vmem:[#allocation10] sm:$0xff] %v1344
    // Predicated region
    $region46: #{tpu_custom_call.1} parent=1 // pred_check
      _
    $region47: #{tpu_custom_call.1} parent=1 // pred_check_branch
      %1351 = sbr.rel (0) target = $region49
    $region48: #{tpu_custom_call.1} parent=1 // pred_region
      %s1353 = ssub.s32 128, 128
      %1354 = vsyncadd [#allocation4], %s1353
      %s1356 = sshll.u32 [#allocation10], 4
      %s1357 = int_to_ptr.vmem [resolvable:$true] %s1356
      %1359 = dma.vmem_to_hbm [thread:$0]  %s1357, 128, %s7, [#allocation4]
    $region49: #{tpu_custom_call.1} parent=1 // pred_fallthru
      _
    // Predicated region
    $region50: #{tpu_custom_call.1} parent=1 // pred_check
      _
    $region51: #{tpu_custom_call.1} parent=1 // pred_check_branch
      %1361 = sbr.rel (0) target = $region53
    $region52: #{tpu_custom_call.1} parent=1 // pred_region
      %1362 = dma.done [#allocation4], 128
    $region53: #{tpu_custom_call.1} parent=1 // pred_fallthru
      _
    %1363 = vsyncpa [#allocation3], 1
    %1364 = vsyncpa [#allocation6], 1
    %1365 = vsyncpa [#allocation9], 1
    %1366 = vsyncpa [#allocation4], 1

</llo_original>
